<compile_context>
chip_gen: v7x
topology: tpu7x:2x2x1
jax: 0.10.0
libtpu: 0.0.40
codegen_flags: <defaults>
</compile_context>

<pallas_src>
import functools

import jax
import jax.numpy as jnp
from jax.experimental import pallas as pl
from jax.experimental.pallas import tpu as pltpu


def _round_up(x: int, m: int) -> int:
    return ((x + m - 1) // m) * m


def _rmsnorm_kernel(x_ref, w_ref, o_ref, *, eps):
    # x_ref: (tm, dim) row-tile, w_ref: (1, dim) resident weight.
    x = x_ref[...].astype(jnp.float32)                      # x.float()
    ms = jnp.mean(x * x, axis=-1, keepdims=True)            # (tm, 1)
    inv = jax.lax.rsqrt(ms + eps)                           # EUP rsqrt
    normed = (x * inv).astype(o_ref.dtype)                  # .type_as(x)
    # output * weight (f32 weight), final cast back to the output dtype.
    o_ref[...] = (normed * w_ref[...]).astype(o_ref.dtype)


@functools.partial(jax.jit, static_argnames=("eps", "tm"))
def rmsnorm(x, weight, *, eps=1e-6, tm=None):
    """x: (..., dim); weight: (dim,).  Returns same shape/dtype as x."""
    orig_shape = x.shape
    dim = orig_shape[-1]
    m = 1
    for s in orig_shape[:-1]:
        m *= s
    x2d = x.reshape(m, dim)
    w2d = weight.reshape(1, dim)

    # Sublane alignment: 8 rows for 32-bit inputs, 16 for narrower dtypes.
    sublane = 8 if jnp.dtype(x.dtype).itemsize == 4 else 16
    if tm is None:
        # Memory-bound: pick the biggest row tile that keeps ~1 MiB of f32
        # working set per x tile (double-buffered in + out stays well inside
        # the default scoped-VMEM limit on all of v5e/v6e/v7x).
        budget_bytes = 1 << 20
        tm = max(sublane, budget_bytes // (dim * 4))
    tm_eff = min(_round_up(tm, sublane), _round_up(m, sublane))

    grid = (pl.cdiv(m, tm_eff),)
    bytes_per_elem = jnp.dtype(x.dtype).itemsize
    cost = pl.CostEstimate(
        flops=4 * m * dim,                 # square, reduce, scale, weight-mul
        transcendentals=m,                 # one rsqrt per row
        bytes_accessed=2 * m * dim * bytes_per_elem + dim * 4,
    )

    out2d = pl.pallas_call(
        functools.partial(_rmsnorm_kernel, eps=eps),
        out_shape=jax.ShapeDtypeStruct((m, dim), x.dtype),
        grid_spec=pltpu.PrefetchScalarGridSpec(
            num_scalar_prefetch=0,
            grid=grid,
            in_specs=[
                pl.BlockSpec((tm_eff, dim), lambda i: (i, 0)),  # x row-tile
                pl.BlockSpec((1, dim), lambda i: (0, 0)),       # weight (resident)
            ],
            out_specs=pl.BlockSpec((tm_eff, dim), lambda i: (i, 0)),
        ),
        compiler_params=pltpu.CompilerParams(
            dimension_semantics=("parallel",)),
        cost_estimate=cost,
    )(x2d, w2d)
    return out2d.reshape(orig_shape)


def rmsnorm_ref(x, weight, eps=1e-6):
    xf = x.astype(jnp.float32)
    inv = jax.lax.rsqrt(jnp.mean(xf * xf, axis=-1, keepdims=True) + eps)
    normed = (xf * inv).astype(x.dtype)
    return (normed * weight).astype(x.dtype)


if __name__ == "__main__":
    dim = 512          # module default
    eps = 1e-6
    batch, seq = 2, 8  # small shapes consistent with the module

    key = jax.random.PRNGKey(0)
    kx, kw, kx2, kx3 = jax.random.split(key, 4)

    x = jax.random.normal(kx, (batch, seq, dim), dtype=jnp.float32)
    # Module initializes weight to ones; use a non-trivial weight to actually
    # exercise the scale multiply.
    weight = 1.0 + 0.1 * jax.random.normal(kw, (dim,), dtype=jnp.float32)

    out = jax.block_until_ready(rmsnorm(x, weight, eps=eps))
    ref = rmsnorm_ref(x, weight, eps)
    assert out.shape == x.shape and out.dtype == x.dtype
    assert jnp.allclose(out, ref, atol=1e-5, rtol=1e-5), \
        f"max err {jnp.max(jnp.abs(out - ref))}"

    # Multiple grid steps: m=2048 rows with the adaptive 512-row tile -> 4 steps.
    x_big = jax.random.normal(kx2, (8, 256, dim), dtype=jnp.float32)
    out_big = jax.block_until_ready(rmsnorm(x_big, weight, eps=eps))
    ref_big = rmsnorm_ref(x_big, weight, eps)
    assert jnp.allclose(out_big, ref_big, atol=1e-5, rtol=1e-5), \
        f"max err {jnp.max(jnp.abs(out_big - ref_big))}"

    # bf16 input exercises the .float() -> .type_as(x) path.
    x_bf16 = jax.random.normal(kx3, (batch, seq, dim), dtype=jnp.bfloat16)
    out_bf16 = jax.block_until_ready(rmsnorm(x_bf16, weight, eps=eps))
    ref_bf16 = rmsnorm_ref(x_bf16, weight, eps)
    assert out_bf16.dtype == jnp.bfloat16
    assert jnp.allclose(out_bf16.astype(jnp.float32),
                        ref_bf16.astype(jnp.float32), atol=2e-2, rtol=2e-2), \
        f"max err {jnp.max(jnp.abs(out_bf16.astype(jnp.float32) - ref_bf16.astype(jnp.float32)))}"

    print("KERNEL_OK")
</pallas_src>

<mosaic_0001>
module attributes {stable_mosaic.version = 11 : i64} {
  func.func @_rmsnorm_kernel(%arg0: i32, %arg1: memref<16x512xf32, #tpu.memory_space<vmem>>, %arg2: memref<1x512xf32, #tpu.memory_space<vmem>>, %arg3: memref<16x512xf32, #tpu.memory_space<vmem>>) attributes {dimension_semantics = [#tpu.dimension_semantics<parallel>], iteration_bounds = array<i64: 1>, scalar_prefetch = 0 : i64, scratch_operands = 0 : i64, tpu.core_type = #tpu.core_type<tc>, window_params = [{transform_indices = @transform_0, window_bounds = array<i64: 16, 512>}, {pipeline_mode = #tpu.pipeline_mode<synchronous>, transform_indices = @transform_1, window_bounds = array<i64: 1, 512>}, {transform_indices = @transform_2, window_bounds = array<i64: 16, 512>}]} {
    %c0 = arith.constant 0 : index
    %c0_0 = arith.constant 0 : index
    %0 = vector.load %arg1[%c0, %c0_0] : memref<16x512xf32, #tpu.memory_space<vmem>>, vector<16x512xf32>
    %1 = arith.mulf %0, %0 : vector<16x512xf32>
    %cst = arith.constant dense<0.000000e+00> : vector<16xf32>
    %2 = vector.multi_reduction <add>, %1, %cst [1] : vector<16x512xf32> to vector<16xf32>
    %3 = vector.shape_cast %2 : vector<16xf32> to vector<16x1xf32>
    %cst_1 = arith.constant 5.120000e+02 : f32
    %4 = vector.broadcast %cst_1 : f32 to vector<16x1xf32>
    %5 = arith.divf %3, %4 : vector<16x1xf32>
    %cst_2 = arith.constant 9.99999997E-7 : f32
    %6 = vector.broadcast %cst_2 : f32 to vector<16x1xf32>
    %7 = arith.addf %5, %6 : vector<16x1xf32>
    %8 = math.rsqrt %7 : vector<16x1xf32>
    %9 = vector.broadcast %8 : vector<16x1xf32> to vector<16x512xf32>
    %10 = arith.mulf %0, %9 : vector<16x512xf32>
    %c0_3 = arith.constant 0 : index
    %c0_4 = arith.constant 0 : index
    %11 = vector.load %arg2[%c0_3, %c0_4] : memref<1x512xf32, #tpu.memory_space<vmem>>, vector<1x512xf32>
    %12 = vector.broadcast %11 : vector<1x512xf32> to vector<16x512xf32>
    %13 = arith.mulf %10, %12 : vector<16x512xf32>
    %c0_5 = arith.constant 0 : index
    %c0_6 = arith.constant 0 : index
    %14 = vector.load %arg3[%c0_5, %c0_6] : memref<16x512xf32, #tpu.memory_space<vmem>>, vector<16x512xf32>
    tpu.vector_store %arg3[%c0_5, %c0_6], %13 {strides = array<i32>} : memref<16x512xf32, #tpu.memory_space<vmem>>, vector<16x512xf32>,
    return
  }
  func.func @transform_0(%arg0: i32) -> (i32, i32) {
    %c0_i32 = arith.constant 0 : i32
    %c0_i32_0 = arith.constant 0 : i32
    return %arg0, %c0_i32 : i32, i32
  }
  func.func @transform_1(%arg0: i32) -> (i32, i32) {
    %c0_i32 = arith.constant 0 : i32
    %c0_i32_0 = arith.constant 0 : i32
    %c0_i32_1 = arith.constant 0 : i32
    return %c0_i32, %c0_i32_0 : i32, i32
  }
  func.func @transform_2(%arg0: i32) -> (i32, i32) {
    %c0_i32 = arith.constant 0 : i32
    %c0_i32_0 = arith.constant 0 : i32
    return %arg0, %c0_i32 : i32, i32
  }
}

</mosaic_0001>

<llo_original>
// kernel: rmsnorm.1
$region0: #{rmsnorm.1}
  #allocation0 [shape = 'u32[]', space=smem, size = 0x4, offset = 0x4, fixed_abs, tag = 'smem constant byte address 0x4 - core index']
  #allocation1 [shape = 'u32[144,128]{1,0:T(1,128)}', space=vmem, size = 0x12000, scoped, tag = 'internal scratch']
  %s0 = inlined_call_operand.hbm [shape: f32[16,512], index: 0, kind: input, shape index: {}]
  %s1 = inlined_call_operand.vmem [shape: f32[1,512], index: 1, kind: input, shape index: {}]
  %s2 = inlined_call_operand.hbm [shape: f32[16,512], index: 2, kind: output, shape index: {}]
  %s3 = sld [smem:[#allocation0]]
  $region22: #{rmsnorm.1} parent=0
    _
  %s5 = ssub.s32 1, %s3
  %s6 = scalar_select 0, %s5, %s3
  $region1: #{rmsnorm.1} parent=0
    #allocation2 [shape = 'u8[32768]{0}', space=vmem, size = 0x8000, scoped, tag = 'input window, operand 0, single buffered']
    #allocation3 [shape = 's32[1]{0}', space=sflag, size = 0x4, scoped, tag = 'scoped memory for rmsnorm.1']
    #allocation4 [shape = 's32[1]{0}', space=sflag, size = 0x4, scoped, tag = 'scoped memory for rmsnorm.1']
    #allocation5 [shape = 'u8[32768]{0}', space=vmem, size = 0x8000, scoped, tag = 'output window, operand 0, single buffered']
    %7 = vsyncpa [#allocation3], 0
    %8 = vsyncpa [#allocation4], 0
    // Predicated region
    $region2: #{rmsnorm.1} parent=1 // pred_check
      _
    $region3: #{rmsnorm.1} parent=1 // pred_check_branch
      %10 = sbr.rel (0) target = $region5
    $region4: #{rmsnorm.1} parent=1 // pred_region
      %s12 = ssub.s32 1024, 1024
      %13 = vsyncadd [#allocation3], %s12
      %s14 = sshll.u32 [#allocation2], 4
      %s15 = int_to_ptr.vmem [resolvable:$true] %s14
      %20 = dma.hbm_to_vmem [thread:$0]  %s0, 1024, %s15, [#allocation3], 512, 512, 32
    $region5: #{rmsnorm.1} parent=1 // pred_fallthru
      _
    // Predicated region
    $region6: #{rmsnorm.1} parent=1 // pred_check
      _
    $region7: #{rmsnorm.1} parent=1 // pred_check_branch
      %22 = sbr.rel (0) target = $region9
    $region8: #{rmsnorm.1} parent=1 // pred_region
      _
    $region9: #{rmsnorm.1} parent=1 // pred_fallthru
      _
    // Predicated region
    $region10: #{rmsnorm.1} parent=1 // pred_check
      _
    $region11: #{rmsnorm.1} parent=1 // pred_check_branch
      %24 = sbr.rel (0) target = $region13
    $region12: #{rmsnorm.1} parent=1 // pred_region
      %25 = dma.done [#allocation3], 1024
    $region13: #{rmsnorm.1} parent=1 // pred_fallthru
      _
    %v26 = vld [vmem:[#allocation2] sm:$0xff]
    %v27 = vld [vmem:[#allocation2 + $0x8] sm:$0xff]
    %v28 = vld [vmem:[#allocation2 + $0x10] sm:$0xff]
    %v29 = vld [vmem:[#allocation2 + $0x18] sm:$0xff]
    %v30 = vld [vmem:[#allocation2 + $0x20] sm:$0xff]
    %v31 = vld [vmem:[#allocation2 + $0x28] sm:$0xff]
    %v32 = vld [vmem:[#allocation2 + $0x30] sm:$0xff]
    %v33 = vld [vmem:[#allocation2 + $0x38] sm:$0xff]
    %v34 = vmul.f32 %v26, %v26
    %v35 = vmul.f32 %v27, %v27
    %v36 = vmul.f32 %v28, %v28
    %v37 = vmul.f32 %v29, %v29
    %v38 = vmul.f32 %v30, %v30
    %v39 = vmul.f32 %v31, %v31
    %v40 = vmul.f32 %v32, %v32
    %v41 = vmul.f32 %v33, %v33
    %v42 = vadd.f32 %v34, %v35
    %v43 = vadd.f32 %v42, %v36
    %v44 = vadd.f32 %v43, %v37
    %45 = vadd.xlane.f32.xlu0 %v44
    %v46 = vpop.xlane.xlu0 %45
    %v47 = vadd.f32 %v38, %v39
    %v48 = vadd.f32 %v47, %v40
    %v49 = vadd.f32 %v48, %v41
    %50 = vadd.xlane.f32.xlu0 %v49
    %v51 = vpop.xlane.xlu0 %50
    %v52 = vrcp.pop 512.0
    %v53 = vmul.f32 %v46, %v52
    %v54 = vmul.f32 %v51, %v52
    %v55 = vadd.f32 %v53, 1e-06
    %v56 = vadd.f32 %v54, 1e-06
    %v57 = vrsqrt.pop %v55
    %v58 = vrsqrt.pop %v56
    %v59 = vmul.f32 %v26, %v57
    %v60 = vmul.f32 %v27, %v57
    %v61 = vmul.f32 %v28, %v57
    %v62 = vmul.f32 %v29, %v57
    %v63 = vmul.f32 %v30, %v58
    %v64 = vmul.f32 %v31, %v58
    %v65 = vmul.f32 %v32, %v58
    %v66 = vmul.f32 %v33, %v58
    %v67 = vld [vmem:[%s1] sm:$0xf]
    %v69 = vlaneseq
    %v70 = vshrl.u32 %v69, 7
    %v71 = vsub.s32 0, %v70
    %v72 = vrot.slane %v67, %v71
    %v73 = vlaneseq
    %v74 = vshrl.u32 %v73, 7
    %v75 = vsub.s32 1, %v74
    %v76 = vrot.slane %v67, %v75
    %v77 = vlaneseq
    %v78 = vshrl.u32 %v77, 7
    %v79 = vsub.s32 2, %v78
    %v80 = vrot.slane %v67, %v79
    %v81 = vlaneseq
    %v82 = vshrl.u32 %v81, 7
    %v83 = vsub.s32 3, %v82
    %v84 = vrot.slane %v67, %v83
    %v89 = vmul.f32 %v59, %v72
    %v90 = vmul.f32 %v60, %v76
    %v91 = vmul.f32 %v61, %v80
    %v92 = vmul.f32 %v62, %v84
    %v93 = vmul.f32 %v63, %v72
    %v94 = vmul.f32 %v64, %v76
    %v95 = vmul.f32 %v65, %v80
    %v96 = vmul.f32 %v66, %v84
    %97 = vst [vmem:[#allocation5] sm:$0xff] %v89
    %98 = vst [vmem:[#allocation5 + $0x8] sm:$0xff] %v90
    %99 = vst [vmem:[#allocation5 + $0x10] sm:$0xff] %v91
    %100 = vst [vmem:[#allocation5 + $0x18] sm:$0xff] %v92
    %101 = vst [vmem:[#allocation5 + $0x20] sm:$0xff] %v93
    %102 = vst [vmem:[#allocation5 + $0x28] sm:$0xff] %v94
    %103 = vst [vmem:[#allocation5 + $0x30] sm:$0xff] %v95
    %104 = vst [vmem:[#allocation5 + $0x38] sm:$0xff] %v96
    // Predicated region
    $region14: #{rmsnorm.1} parent=1 // pred_check
      _
    $region15: #{rmsnorm.1} parent=1 // pred_check_branch
      %106 = sbr.rel (0) target = $region17
    $region16: #{rmsnorm.1} parent=1 // pred_region
      %s108 = ssub.s32 1024, 1024
      %109 = vsyncadd [#allocation4], %s108
      %s110 = sshll.u32 [#allocation5], 4
      %s111 = int_to_ptr.vmem [resolvable:$true] %s110
      %116 = dma.vmem_to_hbm [thread:$0]  %s111, 1024, %s2, [#allocation4], 512, 512, 32
    $region17: #{rmsnorm.1} parent=1 // pred_fallthru
      _
    // Predicated region
    $region18: #{rmsnorm.1} parent=1 // pred_check
      _
    $region19: #{rmsnorm.1} parent=1 // pred_check_branch
      %118 = sbr.rel (0) target = $region21
    $region20: #{rmsnorm.1} parent=1 // pred_region
      %119 = dma.done [#allocation4], 1024
    $region21: #{rmsnorm.1} parent=1 // pred_fallthru
      _
    %120 = vsyncpa [#allocation3], 1
    %121 = vsyncpa [#allocation4], 1

</llo_original>
